<compile_context>
chip_gen: v6e
topology: v6e:2x2x1
jax: 0.10.0
libtpu: 0.0.40
codegen_flags: <defaults>
</compile_context>

<pallas_src>
import functools

import jax
import jax.numpy as jnp
from jax.experimental import pallas as pl
from jax.experimental.pallas import tpu as pltpu


_LANES = 128


def _vmem_spec():
    return pl.BlockSpec(memory_space=pltpu.MemorySpace.VMEM)


def _round_up(x, m):
    return ((x + m - 1) // m) * m


def _nbytes(a):
    return int(a.size) * a.dtype.itemsize


def _vmem_limit_bytes(arrays, out_bytes):
    total = sum(_nbytes(a) for a in arrays) + int(out_bytes)
    # 2x headroom for staging; floor 32 MiB (> v5e's 16 MiB default scoped
    # limit), cap 64 MiB (v7x physical VMEM).
    return int(min(64 << 20, max(32 << 20, 2 * total + (4 << 20))))


# ------------------------- parameter packing (offline) ----------------------

class _ParamPacker:
    """Packs many small weight / bias tensors into two flat VMEM slabs.

    Weights -> bf16 slab (rows padded to 16 = bf16 sublane tile, 128 lanes).
    Biases  -> f32 slab (one row each, 128 lanes).
    Returns static (row-offset, rows, cols) metadata used for zero-cost
    `ref[a:b, :c]` slices inside the kernel.
    """

    def __init__(self, lanes=_LANES):
        self.lanes = lanes
        self._w_blocks = []
        self._w_off = 0
        self._b_rows = []
        self._b_off = 0

    def add_weight(self, w):                      # w: (K, C), C <= lanes
        k, c = w.shape
        kp = _round_up(k, 16)
        blk = jnp.zeros((kp, self.lanes), jnp.bfloat16)
        blk = blk.at[:k, :c].set(w.astype(jnp.bfloat16))
        off = self._w_off
        self._w_blocks.append(blk)
        self._w_off += kp
        return off, k

    def add_bias(self, b):                        # b: (1, C)
        c = b.shape[-1]
        row = jnp.zeros((1, self.lanes), jnp.float32)
        row = row.at[0, :c].set(b.reshape(-1).astype(jnp.float32))
        idx = self._b_off
        self._b_rows.append(row)
        self._b_off += 1
        return idx

    def finalize(self):
        w_pack = jnp.concatenate(self._w_blocks, axis=0)
        rows = list(self._b_rows)
        pad = _round_up(len(rows), 8) - len(rows)
        if pad:
            rows.append(jnp.zeros((pad, self.lanes), jnp.float32))
        b_pack = jnp.concatenate(rows, axis=0)
        return w_pack, b_pack


def _pack_head(packer, layers):
    """Pack an MLP head; last layer's output zero-padded to 128 lanes."""
    meta = []
    n = len(layers)
    for i, (w, b) in enumerate(layers):
        off, k = packer.add_weight(w)
        b_idx = packer.add_bias(b)
        c = _LANES if i == n - 1 else w.shape[1]
        meta.append((off, k, c, b_idx))
    return tuple(meta), layers[-1][0].shape[1]


def prepare_a2c_params(params):
    packer = _ParamPacker()
    conv_meta = []
    for (wl, wr, bl) in params['convs']:
        wl_off, k = packer.add_weight(wl)
        wr_off, _ = packer.add_weight(wr)
        b_idx = packer.add_bias(bl)
        conv_meta.append((wl_off, wr_off, k, wl.shape[1], b_idx))
    actor_meta, actor_dim = _pack_head(packer, params['actor'])
    critic_meta, critic_dim = _pack_head(packer, params['critic'])
    w_pack, b_pack = packer.finalize()
    return dict(w_pack=w_pack, b_pack=b_pack, conv_meta=tuple(conv_meta),
                actor_meta=actor_meta, critic_meta=critic_meta,
                actor_dim=actor_dim, critic_dim=critic_dim)


def prepare_mlp_params(layers):
    packer = _ParamPacker()
    meta, out_dim = _pack_head(packer, layers)
    w_pack, b_pack = packer.finalize()
    return dict(w_pack=w_pack, b_pack=b_pack, meta=meta, out_dim=out_dim)


def prepare_params(params):
    return {
        'a2c': prepare_a2c_params(params),
        'origin': prepare_mlp_params(params['origin']),
        'neighbor': prepare_mlp_params(params['neighbor']),
    }


# ----------------------------- Pallas kernels ------------------------------

def _mlp_kernel(x_ref, w_ref, b_ref, o_ref, *, meta):
    """Fused MLP: (Linear + ReLU)^(n-1) -> Linear. Packed weights in VMEM."""
    h = x_ref[...].astype(jnp.float32)
    n = len(meta)
    for i, (w_off, k, c, b_idx) in enumerate(meta):
        w = w_ref[w_off:w_off + k, :c]                      # bf16, static view
        b = b_ref[b_idx:b_idx + 1, :c]                      # f32
        h = jnp.dot(h.astype(w.dtype), w,
                    preferred_element_type=jnp.float32) + b
        if i != n - 1:
            h = jnp.maximum(h, 0.0)
    o_ref[...] = h.astype(o_ref.dtype)


def _a2c_kernel(a_ref, x_ref, pool_ref, w_ref, b_ref,
                actor_out_ref, critic_out_ref, *,
                conv_meta, actor_meta, critic_meta):
    """Fused a2c forward: SAGE convs + actor MLP + mean-pool + critic MLP."""
    a = a_ref[...]                                          # (N, N) f32 (exact 1/deg)
    h = x_ref[...].astype(jnp.float32)                      # (N, F)

    # --- SAGE conv stack: agg @ W_l + h @ W_r + b_l (two bf16 dots, f32 acc)
    n_convs = len(conv_meta)
    for n, (wl_off, wr_off, k, c, b_idx) in enumerate(conv_meta):
        agg = jnp.dot(a, h, preferred_element_type=jnp.float32)   # mean aggregation, f32
        wl = w_ref[wl_off:wl_off + k, :c]
        wr = w_ref[wr_off:wr_off + k, :c]
        b = b_ref[b_idx:b_idx + 1, :c]
        y = (jnp.dot(agg.astype(wl.dtype), wl, preferred_element_type=jnp.float32)
             + jnp.dot(h.astype(wr.dtype), wr, preferred_element_type=jnp.float32)
             + b)
        if n != n_convs - 1:
            y = jnp.maximum(y, 0.0)                         # f32 epilogue
        h = y

    # --- actor head on node features (last layer lane-padded to 128)
    act = h
    n_actor = len(actor_meta)
    for i, (w_off, k, c, b_idx) in enumerate(actor_meta):
        w = w_ref[w_off:w_off + k, :c]
        act = jnp.dot(act.astype(w.dtype), w,
                      preferred_element_type=jnp.float32) + b_ref[b_idx:b_idx + 1, :c]
        if i != n_actor - 1:
            act = jnp.maximum(act, 0.0)
    actor_out_ref[...] = act.astype(actor_out_ref.dtype)

    # --- global mean pool (f32) + critic head
    cri = jnp.dot(pool_ref[...], h, preferred_element_type=jnp.float32)
    n_critic = len(critic_meta)
    for i, (w_off, k, c, b_idx) in enumerate(critic_meta):
        w = w_ref[w_off:w_off + k, :c]
        cri = jnp.dot(cri.astype(w.dtype), w,
                      preferred_element_type=jnp.float32) + b_ref[b_idx:b_idx + 1, :c]
        if i != n_critic - 1:
            cri = jnp.maximum(cri, 0.0)
    critic_out_ref[...] = cri.astype(critic_out_ref.dtype)


# ------------------------------- wrappers -----------------------------------

def mlp_forward(packed, x):
    m = x.shape[0]
    vmem = _vmem_limit_bytes([x, packed['w_pack'], packed['b_pack']],
                             m * _LANES * 4)
    out_pad = pl.pallas_call(
        functools.partial(_mlp_kernel, meta=packed['meta']),
        out_shape=jax.ShapeDtypeStruct((m, _LANES), jnp.float32),
        in_specs=[_vmem_spec()] * 3,
        out_specs=_vmem_spec(),
        compiler_params=pltpu.CompilerParams(vmem_limit_bytes=vmem),
    )(x, packed['w_pack'], packed['b_pack'])
    return out_pad[:, :packed['out_dim']]


def a2c_forward(packed, x, a_mean, pool):
    num_nodes = x.shape[0]
    num_graphs = pool.shape[0]
    vmem = _vmem_limit_bytes(
        [a_mean, x, pool, packed['w_pack'], packed['b_pack']],
        (num_nodes + num_graphs) * _LANES * 4)
    actor_pad, critic_pad = pl.pallas_call(
        functools.partial(_a2c_kernel,
                          conv_meta=packed['conv_meta'],
                          actor_meta=packed['actor_meta'],
                          critic_meta=packed['critic_meta']),
        out_shape=(
            jax.ShapeDtypeStruct((num_nodes, _LANES), jnp.float32),
            jax.ShapeDtypeStruct((num_graphs, _LANES), jnp.float32),
        ),
        in_specs=[_vmem_spec()] * 5,
        out_specs=(_vmem_spec(), _vmem_spec()),
        compiler_params=pltpu.CompilerParams(vmem_limit_bytes=vmem),
    )(a_mean, x, pool, packed['w_pack'], packed['b_pack'])
    return (actor_pad[:, :packed['actor_dim']],
            critic_pad[:, :packed['critic_dim']])


# ------------------------------- glue (JAX) --------------------------------

def mean_adjacency(edge_index, num_nodes):
    """Row-normalized adjacency: row i = mean over incoming edges (src->dst).

    Kept in f32 (not bf16) so the 1/deg scaling matches the PyG scatter-mean
    reference exactly.
    """
    src, dst = edge_index[0], edge_index[1]
    a = jnp.zeros((num_nodes, num_nodes), jnp.float32)
    a = a.at[dst, src].add(1.0)                      # message flows src -> dst
    deg = a.sum(axis=1, keepdims=True)
    a = jnp.where(deg > 0, a / jnp.where(deg > 0, deg, 1.0), 0.0)
    return a


def mean_pool_matrix(batch, num_graphs, num_nodes):
    """global_mean_pool as a (num_graphs, num_nodes) f32 matrix."""
    p = jnp.zeros((num_graphs, num_nodes), jnp.float32)
    p = p.at[batch, jnp.arange(num_nodes)].set(1.0)
    cnt = p.sum(axis=1, keepdims=True)
    return p / jnp.where(cnt > 0, cnt, 1.0)


# --------------------------- parameter building ----------------------------

def init_linear(key, fan_in, fan_out):
    kw, kb = jax.random.split(key)
    limit = 1.0 / jnp.sqrt(jnp.float32(fan_in))
    w = jax.random.uniform(kw, (fan_in, fan_out), jnp.float32, -limit, limit)
    b = jax.random.uniform(kb, (1, fan_out), jnp.float32, -limit, limit)
    return w, b


def init_mlp(key, channels_list):
    layers = []
    keys = jax.random.split(key, len(channels_list) - 1)
    for i, k in enumerate(keys):
        layers.append(init_linear(k, channels_list[i], channels_list[i + 1]))
    return layers


class Config:
    conv = 'SAGE'
    num_convs = 2
    hidden_channels = 32
    actor_mlp_layers = 2
    actor_mlp_list = [32, 32, 4]
    critic_mlp_layers = 2
    critic_mlp_list = [32, 32, 1]
    origin_mlp_layers = 2
    origin_mlp_list = [8, 32, 1]
    neighbor_mlp_layers = 2
    neighbor_mlp_list = [8, 32, 1]


def init_params(key, config, in_channels):
    keys = jax.random.split(key, config.num_convs + 4)
    convs = []
    c_in = in_channels
    for n in range(config.num_convs):
        k_l, k_r = jax.random.split(keys[n])
        wl, bl = init_linear(k_l, c_in, config.hidden_channels)   # lin_l (bias)
        wr, _ = init_linear(k_r, c_in, config.hidden_channels)    # lin_r (no bias)
        convs.append((wl, wr, bl))
        c_in = config.hidden_channels
    return {
        'convs': convs,
        'actor': init_mlp(keys[-4], config.actor_mlp_list),
        'critic': init_mlp(keys[-3], config.critic_mlp_list),
        'origin': init_mlp(keys[-2], config.origin_mlp_list),
        'neighbor': init_mlp(keys[-1], config.neighbor_mlp_list),
    }


# ------------------------------ model forward ------------------------------

def model_nup_forward(prepared, mode, x, edge_index=None, batch=None,
                      num_graphs=None):
    if mode == 'a2c':
        assert edge_index is not None and batch is not None
        num_nodes = x.shape[0]
        a_mean = mean_adjacency(edge_index, num_nodes)
        pool = mean_pool_matrix(batch, num_graphs, num_nodes)
        return a2c_forward(prepared['a2c'], x, a_mean, pool)
    elif mode == 'origin':
        return mlp_forward(prepared['origin'], x)
    elif mode == 'neighbor':
        return mlp_forward(prepared['neighbor'], x)
    else:
        raise ValueError('Invalid Model_NUP forward mode!')


# --------------------------- pure-JAX reference ----------------------------

def _ref_mlp(layers, z):
    for i, (w, b) in enumerate(layers):
        z = z @ w + b
        if i != len(layers) - 1:
            z = jnp.maximum(z, 0.0)
    return z


def _ref_a2c(params, x, edge_index, batch, num_graphs):
    num_nodes = x.shape[0]
    a = mean_adjacency(edge_index, num_nodes)
    h = x
    for n, (wl, wr, bl) in enumerate(params['convs']):
        y = (a @ h) @ wl + bl + h @ wr
        if n != len(params['convs']) - 1:
            y = jnp.maximum(y, 0.0)
        h = y
    actor = _ref_mlp(params['actor'], h)
    pool = mean_pool_matrix(batch, num_graphs, num_nodes)
    critic = _ref_mlp(params['critic'], pool @ h)
    return actor, critic


# ----------------------------------- main -----------------------------------

if __name__ == "__main__":
    config = Config()
    N_NODES, F_IN, N_GRAPHS, N_EDGES = 16, 8, 2, 40

    root = jax.random.PRNGKey(0)
    k_params, k_x, k_src, k_dst = jax.random.split(root, 4)

    params = init_params(k_params, config, F_IN)
    prepared = prepare_params(params)          # pack weights once (offline)

    x = jax.random.normal(k_x, (N_NODES, F_IN), jnp.float32)
    src = jax.random.randint(k_src, (N_EDGES,), 0, N_NODES, jnp.int32)
    dst = jax.random.randint(k_dst, (N_EDGES,), 0, N_NODES, jnp.int32)
    edge_index = jnp.stack([src, dst], axis=0)            # [2, E]
    batch = jnp.concatenate([
        jnp.zeros(N_NODES // 2, jnp.int32),
        jnp.ones(N_NODES - N_NODES // 2, jnp.int32),
    ])

    actor, critic = model_nup_forward(prepared, 'a2c', x, edge_index, batch,
                                      num_graphs=N_GRAPHS)
    origin_out = model_nup_forward(prepared, 'origin', x)
    neighbor_out = model_nup_forward(prepared, 'neighbor', x)

    jax.block_until_ready((actor, critic, origin_out, neighbor_out))

    assert actor.shape == (N_NODES, config.actor_mlp_list[-1])
    assert critic.shape == (N_GRAPHS, config.critic_mlp_list[-1])
    assert origin_out.shape == (N_NODES, config.origin_mlp_list[-1])
    assert neighbor_out.shape == (N_NODES, config.neighbor_mlp_list[-1])
    assert bool(jnp.all(jnp.isfinite(actor))) and bool(jnp.all(jnp.isfinite(critic)))
    assert bool(jnp.all(jnp.isfinite(origin_out))) and bool(jnp.all(jnp.isfinite(neighbor_out)))

    # Numerical sanity vs. f32 reference (bf16 weights -> ~1e-2 tolerance).
    actor_ref, critic_ref = _ref_a2c(params, x, edge_index, batch, N_GRAPHS)
    origin_ref = _ref_mlp(params['origin'], x)
    neighbor_ref = _ref_mlp(params['neighbor'], x)
    for got, ref in ((actor, actor_ref), (critic, critic_ref),
                     (origin_out, origin_ref), (neighbor_out, neighbor_ref)):
        assert float(jnp.max(jnp.abs(got - ref))) < 1e-1

    print("KERNEL_OK")
</pallas_src>

<mosaic_0001>
module attributes {stable_mosaic.version = 11 : i64} {
  func.func @_a2c_kernel(%arg0: memref<16x16xf32, #tpu.memory_space<vmem>>, %arg1: memref<16x8xf32, #tpu.memory_space<vmem>>, %arg2: memref<2x16xf32, #tpu.memory_space<vmem>>, %arg3: memref<224x128xbf16, #tpu.memory_space<vmem>>, %arg4: memref<8x128xf32, #tpu.memory_space<vmem>>, %arg5: memref<16x128xf32, #tpu.memory_space<vmem>>, %arg6: memref<2x128xf32, #tpu.memory_space<vmem>>) attributes {dimension_semantics = [], scalar_prefetch = 0 : i64, scratch_operands = 0 : i64, tpu.core_type = #tpu.core_type<tc>} {
    %c0 = arith.constant 0 : index
    %c0_0 = arith.constant 0 : index
    %0 = vector.load %arg0[%c0, %c0_0] : memref<16x16xf32, #tpu.memory_space<vmem>>, vector<16x16xf32>
    %c0_1 = arith.constant 0 : index
    %c0_2 = arith.constant 0 : index
    %1 = vector.load %arg1[%c0_1, %c0_2] : memref<16x8xf32, #tpu.memory_space<vmem>>, vector<16x8xf32>
    %cst = arith.constant dense<0.000000e+00> : vector<16x8xf32>
    %2 = tpu.matmul %0, %1, %cst {dimension_numbers = #tpu.dot_dimension_numbers<[1], [0], [0], [1], [0, 0, 1, 1], [], []>} : vector<16x16xf32>, vector<16x8xf32>, vector<16x8xf32> -> vector<16x8xf32>
    %c0_3 = arith.constant 0 : index
    %c0_4 = arith.constant 0 : index
    %3 = vector.load %arg3[%c0_3, %c0_4] : memref<224x128xbf16, #tpu.memory_space<vmem>>, vector<8x32xbf16>
    %c16 = arith.constant 16 : index
    %c0_5 = arith.constant 0 : index
    %4 = vector.load %arg3[%c16, %c0_5] : memref<224x128xbf16, #tpu.memory_space<vmem>>, vector<8x32xbf16>
    %c0_6 = arith.constant 0 : index
    %c0_7 = arith.constant 0 : index
    %5 = vector.load %arg4[%c0_6, %c0_7] : memref<8x128xf32, #tpu.memory_space<vmem>>, vector<1x32xf32>
    %6 = arith.truncf %2 : vector<16x8xf32> to vector<16x8xbf16>
    %cst_8 = arith.constant dense<0.000000e+00> : vector<16x32xf32>
    %7 = tpu.matmul %6, %3, %cst_8 {dimension_numbers = #tpu.dot_dimension_numbers<[1], [0], [0], [1], [0, 0, 1, 1], [], []>} : vector<16x8xbf16>, vector<8x32xbf16>, vector<16x32xf32> -> vector<16x32xf32>
    %8 = arith.truncf %1 : vector<16x8xf32> to vector<16x8xbf16>
    %cst_9 = arith.constant dense<0.000000e+00> : vector<16x32xf32>
    %9 = tpu.matmul %8, %4, %cst_9 {dimension_numbers = #tpu.dot_dimension_numbers<[1], [0], [0], [1], [0, 0, 1, 1], [], []>} : vector<16x8xbf16>, vector<8x32xbf16>, vector<16x32xf32> -> vector<16x32xf32>
    %10 = arith.addf %7, %9 : vector<16x32xf32>
    %11 = vector.broadcast %5 : vector<1x32xf32> to vector<16x32xf32>
    %12 = arith.addf %10, %11 : vector<16x32xf32>
    %cst_10 = arith.constant 0.000000e+00 : f32
    %13 = vector.broadcast %cst_10 : f32 to vector<16x32xf32>
    %14 = arith.maximumf %12, %13 : vector<16x32xf32>
    %cst_11 = arith.constant dense<0.000000e+00> : vector<16x32xf32>
    %15 = tpu.matmul %0, %14, %cst_11 {dimension_numbers = #tpu.dot_dimension_numbers<[1], [0], [0], [1], [0, 0, 1, 1], [], []>} : vector<16x16xf32>, vector<16x32xf32>, vector<16x32xf32> -> vector<16x32xf32>
    %c32 = arith.constant 32 : index
    %c0_12 = arith.constant 0 : index
    %16 = vector.load %arg3[%c32, %c0_12] : memref<224x128xbf16, #tpu.memory_space<vmem>>, vector<32x32xbf16>
    %c64 = arith.constant 64 : index
    %c0_13 = arith.constant 0 : index
    %17 = vector.load %arg3[%c64, %c0_13] : memref<224x128xbf16, #tpu.memory_space<vmem>>, vector<32x32xbf16>
    %c1 = arith.constant 1 : index
    %c0_14 = arith.constant 0 : index
    %18 = vector.load %arg4[%c1, %c0_14] : memref<8x128xf32, #tpu.memory_space<vmem>>, vector<1x32xf32>
    %19 = arith.truncf %15 : vector<16x32xf32> to vector<16x32xbf16>
    %cst_15 = arith.constant dense<0.000000e+00> : vector<16x32xf32>
    %20 = tpu.matmul %19, %16, %cst_15 {dimension_numbers = #tpu.dot_dimension_numbers<[1], [0], [0], [1], [0, 0, 1, 1], [], []>} : vector<16x32xbf16>, vector<32x32xbf16>, vector<16x32xf32> -> vector<16x32xf32>
    %21 = arith.truncf %14 : vector<16x32xf32> to vector<16x32xbf16>
    %cst_16 = arith.constant dense<0.000000e+00> : vector<16x32xf32>
    %22 = tpu.matmul %21, %17, %cst_16 {dimension_numbers = #tpu.dot_dimension_numbers<[1], [0], [0], [1], [0, 0, 1, 1], [], []>} : vector<16x32xbf16>, vector<32x32xbf16>, vector<16x32xf32> -> vector<16x32xf32>
    %23 = arith.addf %20, %22 : vector<16x32xf32>
    %24 = vector.broadcast %18 : vector<1x32xf32> to vector<16x32xf32>
    %25 = arith.addf %23, %24 : vector<16x32xf32>
    %c96 = arith.constant 96 : index
    %c0_17 = arith.constant 0 : index
    %26 = vector.load %arg3[%c96, %c0_17] : memref<224x128xbf16, #tpu.memory_space<vmem>>, vector<32x32xbf16>
    %27 = arith.truncf %25 : vector<16x32xf32> to vector<16x32xbf16>
    %cst_18 = arith.constant dense<0.000000e+00> : vector<16x32xf32>
    %28 = tpu.matmul %27, %26, %cst_18 {dimension_numbers = #tpu.dot_dimension_numbers<[1], [0], [0], [1], [0, 0, 1, 1], [], []>} : vector<16x32xbf16>, vector<32x32xbf16>, vector<16x32xf32> -> vector<16x32xf32>
    %c2 = arith.constant 2 : index
    %c0_19 = arith.constant 0 : index
    %29 = vector.load %arg4[%c2, %c0_19] : memref<8x128xf32, #tpu.memory_space<vmem>>, vector<1x32xf32>
    %30 = vector.broadcast %29 : vector<1x32xf32> to vector<16x32xf32>
    %31 = arith.addf %28, %30 : vector<16x32xf32>
    %cst_20 = arith.constant 0.000000e+00 : f32
    %32 = vector.broadcast %cst_20 : f32 to vector<16x32xf32>
    %33 = arith.maximumf %31, %32 : vector<16x32xf32>
    %c128 = arith.constant 128 : index
    %c0_21 = arith.constant 0 : index
    %34 = vector.load %arg3[%c128, %c0_21] : memref<224x128xbf16, #tpu.memory_space<vmem>>, vector<32x128xbf16>
    %35 = arith.truncf %33 : vector<16x32xf32> to vector<16x32xbf16>
    %cst_22 = arith.constant dense<0.000000e+00> : vector<16x128xf32>
    %36 = tpu.matmul %35, %34, %cst_22 {dimension_numbers = #tpu.dot_dimension_numbers<[1], [0], [0], [1], [0, 0, 1, 1], [], []>} : vector<16x32xbf16>, vector<32x128xbf16>, vector<16x128xf32> -> vector<16x128xf32>
    %c3 = arith.constant 3 : index
    %c0_23 = arith.constant 0 : index
    %37 = vector.load %arg4[%c3, %c0_23] : memref<8x128xf32, #tpu.memory_space<vmem>>, vector<1x128xf32>
    %38 = vector.broadcast %37 : vector<1x128xf32> to vector<16x128xf32>
    %39 = arith.addf %36, %38 : vector<16x128xf32>
    %c0_24 = arith.constant 0 : index
    %c0_25 = arith.constant 0 : index
    %40 = vector.load %arg5[%c0_24, %c0_25] : memref<16x128xf32, #tpu.memory_space<vmem>>, vector<16x128xf32>
    tpu.vector_store %arg5[%c0_24, %c0_25], %39 {strides = array<i32>} : memref<16x128xf32, #tpu.memory_space<vmem>>, vector<16x128xf32>,
    %c0_26 = arith.constant 0 : index
    %c0_27 = arith.constant 0 : index
    %41 = vector.load %arg2[%c0_26, %c0_27] : memref<2x16xf32, #tpu.memory_space<vmem>>, vector<2x16xf32>
    %cst_28 = arith.constant dense<0.000000e+00> : vector<2x32xf32>
    %42 = tpu.matmul %41, %25, %cst_28 {dimension_numbers = #tpu.dot_dimension_numbers<[1], [0], [0], [1], [0, 0, 1, 1], [], []>} : vector<2x16xf32>, vector<16x32xf32>, vector<2x32xf32> -> vector<2x32xf32>
    %c160 = arith.constant 160 : index
    %c0_29 = arith.constant 0 : index
    %43 = vector.load %arg3[%c160, %c0_29] : memref<224x128xbf16, #tpu.memory_space<vmem>>, vector<32x32xbf16>
    %44 = arith.truncf %42 : vector<2x32xf32> to vector<2x32xbf16>
    %cst_30 = arith.constant dense<0.000000e+00> : vector<2x32xf32>
    %45 = tpu.matmul %44, %43, %cst_30 {dimension_numbers = #tpu.dot_dimension_numbers<[1], [0], [0], [1], [0, 0, 1, 1], [], []>} : vector<2x32xbf16>, vector<32x32xbf16>, vector<2x32xf32> -> vector<2x32xf32>
    %c4 = arith.constant 4 : index
    %c0_31 = arith.constant 0 : index
    %46 = vector.load %arg4[%c4, %c0_31] : memref<8x128xf32, #tpu.memory_space<vmem>>, vector<1x32xf32>
    %47 = vector.broadcast %46 : vector<1x32xf32> to vector<2x32xf32>
    %48 = arith.addf %45, %47 : vector<2x32xf32>
    %cst_32 = arith.constant 0.000000e+00 : f32
    %49 = vector.broadcast %cst_32 : f32 to vector<2x32xf32>
    %50 = arith.maximumf %48, %49 : vector<2x32xf32>
    %c192 = arith.constant 192 : index
    %c0_33 = arith.constant 0 : index
    %51 = vector.load %arg3[%c192, %c0_33] : memref<224x128xbf16, #tpu.memory_space<vmem>>, vector<32x128xbf16>
    %52 = arith.truncf %50 : vector<2x32xf32> to vector<2x32xbf16>
    %cst_34 = arith.constant dense<0.000000e+00> : vector<2x128xf32>
    %53 = tpu.matmul %52, %51, %cst_34 {dimension_numbers = #tpu.dot_dimension_numbers<[1], [0], [0], [1], [0, 0, 1, 1], [], []>} : vector<2x32xbf16>, vector<32x128xbf16>, vector<2x128xf32> -> vector<2x128xf32>
    %c5 = arith.constant 5 : index
    %c0_35 = arith.constant 0 : index
    %54 = vector.load %arg4[%c5, %c0_35] : memref<8x128xf32, #tpu.memory_space<vmem>>, vector<1x128xf32>
    %55 = vector.broadcast %54 : vector<1x128xf32> to vector<2x128xf32>
    %56 = arith.addf %53, %55 : vector<2x128xf32>
    %c0_36 = arith.constant 0 : index
    %c0_37 = arith.constant 0 : index
    %57 = vector.load %arg6[%c0_36, %c0_37] : memref<2x128xf32, #tpu.memory_space<vmem>>, vector<2x128xf32>
    tpu.vector_store %arg6[%c0_36, %c0_37], %56 {strides = array<i32>} : memref<2x128xf32, #tpu.memory_space<vmem>>, vector<2x128xf32>,
    return
  }
}

</mosaic_0001>

<llo_original>
// kernel: tpu_custom_call.1
$region0: #{tpu_custom_call.1}
  #allocation0 [shape = 'u32[]', space=smem, size = 0x4, offset = 0x4, fixed_abs, tag = 'smem constant byte address 0x4 - core index']
  #allocation1 [shape = 'u32[144,128]{1,0:T(1,128)}', space=vmem, size = 0x12000, scoped, tag = 'internal scratch']
  %s0 = inlined_call_operand.vmem [shape: f32[16,16], index: 0, kind: input, shape index: {}]
  %s1 = inlined_call_operand.vmem [shape: f32[16,8], index: 1, kind: input, shape index: {}]
  %s2 = inlined_call_operand.vmem [shape: f32[2,16], index: 2, kind: input, shape index: {}]
  %s3 = inlined_call_operand.hbm [shape: bf16[224,128], index: 3, kind: input, shape index: {}]
  %s4 = inlined_call_operand.vmem [shape: f32[8,128], index: 4, kind: input, shape index: {}]
  %s5 = inlined_call_operand.hbm [shape: f32[16,128], index: 5, kind: output, shape index: {0}]
  %s6 = inlined_call_operand.hbm [shape: f32[2,128], index: 6, kind: output, shape index: {1}]
  %7 = xla_tuple %s5, %s6
  %s8 = sld [smem:[#allocation0]]
  $region42: #{tpu_custom_call.1} parent=0
    _
  %s10 = ssub.s32 1, %s8
  %s11 = scalar_select 0, %s10, %s8
  $region1: #{tpu_custom_call.1} parent=0
    #allocation2 [shape = 'u8[57344]{0}', space=vmem, size = 0xe000, scoped, tag = 'input window, operand 3, single buffered']
    #allocation3 [shape = 's32[1]{0}', space=sflag, size = 0x4, scoped, tag = 'scoped memory for tpu_custom_call.1']
    #allocation4 [shape = 's32[1]{0}', space=sflag, size = 0x4, scoped, tag = 'scoped memory for tpu_custom_call.1']
    #allocation5 [shape = 'u8[8192]{0}', space=vmem, size = 0x2000, scoped, tag = 'output window, operand 0, single buffered']
    #allocation6 [shape = 'u8[1024]{0}', space=vmem, size = 0x400, scoped, tag = 'output window, operand 1, single buffered']
    #allocation7 [shape = 's32[1]{0}', space=sflag, size = 0x4, scoped, tag = 'scoped memory for tpu_custom_call.1']
    %12 = vsyncpa [#allocation3], 0
    %13 = vsyncpa [#allocation4], 0
    %14 = vsyncpa [#allocation7], 0
    // Predicated region
    $region2: #{tpu_custom_call.1} parent=1 // pred_check
      _
    $region3: #{tpu_custom_call.1} parent=1 // pred_check_branch
      %16 = sbr.rel (0) target = $region5
    $region4: #{tpu_custom_call.1} parent=1 // pred_region
      _
    $region5: #{tpu_custom_call.1} parent=1 // pred_fallthru
      _
    // Predicated region
    $region6: #{tpu_custom_call.1} parent=1 // pred_check
      _
    $region7: #{tpu_custom_call.1} parent=1 // pred_check_branch
      %18 = sbr.rel (0) target = $region9
    $region8: #{tpu_custom_call.1} parent=1 // pred_region
      _
    $region9: #{tpu_custom_call.1} parent=1 // pred_fallthru
      _
    // Predicated region
    $region10: #{tpu_custom_call.1} parent=1 // pred_check
      _
    $region11: #{tpu_custom_call.1} parent=1 // pred_check_branch
      %20 = sbr.rel (0) target = $region13
    $region12: #{tpu_custom_call.1} parent=1 // pred_region
      _
    $region13: #{tpu_custom_call.1} parent=1 // pred_fallthru
      _
    // Predicated region
    $region14: #{tpu_custom_call.1} parent=1 // pred_check
      _
    $region15: #{tpu_custom_call.1} parent=1 // pred_check_branch
      %22 = sbr.rel (0) target = $region17
    $region16: #{tpu_custom_call.1} parent=1 // pred_region
      %s24 = ssub.s32 1792, 1792
      %25 = vsyncadd [#allocation3], %s24
      %s26 = sshll.u32 [#allocation2], 4
      %s27 = int_to_ptr.vmem [resolvable:$true] %s26
      %32 = dma.hbm_to_vmem [thread:$0]  %s3, 1792, %s27, [#allocation3], 64, 64, 4
    $region17: #{tpu_custom_call.1} parent=1 // pred_fallthru
      _
    // Predicated region
    $region18: #{tpu_custom_call.1} parent=1 // pred_check
      _
    $region19: #{tpu_custom_call.1} parent=1 // pred_check_branch
      %34 = sbr.rel (0) target = $region21
    $region20: #{tpu_custom_call.1} parent=1 // pred_region
      _
    $region21: #{tpu_custom_call.1} parent=1 // pred_fallthru
      _
    // Predicated region
    $region22: #{tpu_custom_call.1} parent=1 // pred_check
      _
    $region23: #{tpu_custom_call.1} parent=1 // pred_check_branch
      %36 = sbr.rel (0) target = $region25
    $region24: #{tpu_custom_call.1} parent=1 // pred_region
      %37 = dma.done [#allocation3], 1792
    $region25: #{tpu_custom_call.1} parent=1 // pred_fallthru
      _
    %v39 = vld [vmem:[%s0] sm:$0xff]
    %v40 = vld [vmem:[%s0 + $0x8] sm:$0xff]
    %v41 = vld [vmem:[%s1] sm:$0xff]
    %v42 = vld [vmem:[%s1 + $0x8] sm:$0xff]
    %vm43 = vcmask 130048
    %v45 = vsel %vm43, %v39, 0
    %v48 = vsel %vm43, %v40, 0
    %50 = vmatprep.subr.mxu0 0.0
    %51 = vmatpush1.msra.mxu0 0.0
    %52 = vmatprep.subr.mxu0 0.0
    %53 = vmatpush1.msra.mxu0 0.0
    %54 = vmatprep.subr.mxu0 0.0
    %55 = vmatpush1.msra.mxu0 0.0
    %56 = vmatprep.subr.mxu0 0.0
    %57 = vmatpush1.msra.mxu0 0.0
    %58 = vmatprep.subr.mxu0 0.0
    %59 = vmatpush1.msra.mxu0 0.0
    %60 = vmatprep.subr.mxu0 0.0
    %61 = vmatpush1.msra.mxu0 0.0
    %62 = vmatprep.subr.mxu0 0.0
    %63 = vmatpush1.msra.mxu0 0.0
    %64 = vmatprep.subr.mxu0 0.0
    %65 = vmatpush1.msra.mxu0 0.0
    %66 = vmatprep.subr.mxu0 0.0
    %67 = vmatpush1.msra.mxu0 0.0
    %68 = vmatprep.subr.mxu0 0.0
    %69 = vmatpush1.msra.mxu0 0.0
    %70 = vmatprep.subr.mxu0 0.0
    %71 = vmatpush1.msra.mxu0 0.0
    %72 = vmatprep.subr.mxu0 0.0
    %73 = vmatpush1.msra.mxu0 0.0
    %74 = vmatprep.subr.mxu0 0.0
    %75 = vmatpush1.msra.mxu0 0.0
    %76 = vmatprep.subr.mxu0 0.0
    %77 = vmatpush1.msra.mxu0 0.0
    %78 = vmatprep.subr.mxu0 0.0
    %79 = vmatpush1.msra.mxu0 %v42
    %80 = vmatprep.subr.mxu0 0.0
    %81 = vmatpush1.msra.mxu0 %v41
    %82 = vmatprep.subr.mxu0 0.0
    %83 = vmatpush2.msra.mxu0 0.0
    %84 = vmatprep.subr.mxu0 0.0
    %85 = vmatpush2.msra.mxu0 0.0
    %86 = vmatprep.subr.mxu0 0.0
    %87 = vmatpush2.msra.mxu0 0.0
    %88 = vmatprep.subr.mxu0 0.0
    %89 = vmatpush2.msra.mxu0 0.0
    %90 = vmatprep.subr.mxu0 0.0
    %91 = vmatpush2.msra.mxu0 0.0
    %92 = vmatprep.subr.mxu0 0.0
    %93 = vmatpush2.msra.mxu0 0.0
    %94 = vmatprep.subr.mxu0 0.0
    %95 = vmatpush2.msra.mxu0 0.0
    %96 = vmatprep.subr.mxu0 0.0
    %97 = vmatpush2.msra.mxu0 0.0
    %98 = vmatprep.subr.mxu0 0.0
    %99 = vmatpush2.msra.mxu0 0.0
    %100 = vmatprep.subr.mxu0 0.0
    %101 = vmatpush2.msra.mxu0 0.0
    %102 = vmatprep.subr.mxu0 0.0
    %103 = vmatpush2.msra.mxu0 0.0
    %104 = vmatprep.subr.mxu0 0.0
    %105 = vmatpush2.msra.mxu0 0.0
    %106 = vmatprep.subr.mxu0 0.0
    %107 = vmatpush2.msra.mxu0 0.0
    %108 = vmatprep.subr.mxu0 0.0
    %109 = vmatpush2.msra.mxu0 0.0
    %110 = vmatprep.subr.mxu0 0.0
    %111 = vmatpush2.msra.mxu0 0.0
    %112 = vmatprep.subr.mxu0 0.0
    %113 = vmatpush2.msra.mxu0 0.0
    %114 = vmatprep.mubr.f32.mxu0 0.0
    %115 = vmatmul.mubr.f32.gmra.mxu0 %v45
    %v116 = vpop.f32.mrf.mxu0
    %v117 = vadd.f32 0.0, %v116
    %v118 = vpop.f32.mrf.mxu0
    %119 = vmatprep.mubr.f32.mxu0 0.0
    %120 = vmatmul.mubr.f32.gmra.mxu0 %v48
    %v121 = vpop.f32.mrf.mxu0
    %v122 = vadd.f32 0.0, %v121
    %v123 = vpop.f32.mrf.mxu0
    %124 = vdwg.mxu0
    %v125 = vld [vmem:[#allocation2] sm:$0xf]
    %v126 = vld [vmem:[#allocation2 + $0x8] sm:$0xf]
    %v127 = vld [vmem:[%s4] sm:$0x1]
    %v128 = vpack.c.bf16 %v122, %v117
    %v129 = vpack.c.bf16 %v42, %v41
    %vm130 = vcmask 64512
    %v132 = vsel %vm130, %v129, 0
    %vm134 = vcmask 1043456
    %v136 = vsel %vm134, %v126, 0
    %138 = vmatprep.subr.bf16.mxu0 0
    %139 = vmatpush1.bf16.msra.mxu0 0
    %140 = vmatprep.subr.bf16.mxu0 0
    %141 = vmatpush1.bf16.msra.mxu0 0
    %142 = vmatprep.subr.bf16.mxu0 0
    %143 = vmatpush1.bf16.msra.mxu0 0
    %144 = vmatprep.subr.bf16.mxu0 0
    %145 = vmatpush1.bf16.msra.mxu0 0
    %146 = vmatprep.subr.bf16.mxu0 0
    %147 = vmatpush1.bf16.msra.mxu0 0
    %148 = vmatprep.subr.bf16.mxu0 0
    %149 = vmatpush1.bf16.msra.mxu0 0
    %150 = vmatprep.subr.bf16.mxu0 0
    %151 = vmatpush1.bf16.msra.mxu0 0
    %152 = vmatprep.subr.bf16.mxu0 0
    %153 = vmatpush1.bf16.msra.mxu0 %v136
    %154 = vmatprep.subr.bf16.mxu0 0
    %155 = vmatpush2.bf16.msra.mxu0 0
    %156 = vmatprep.subr.bf16.mxu0 0
    %157 = vmatpush2.bf16.msra.mxu0 0
    %158 = vmatprep.subr.bf16.mxu0 0
    %159 = vmatpush2.bf16.msra.mxu0 0
    %160 = vmatprep.subr.bf16.mxu0 0
    %161 = vmatpush2.bf16.msra.mxu0 0
    %162 = vmatprep.subr.bf16.mxu0 0
    %163 = vmatpush2.bf16.msra.mxu0 0
    %164 = vmatprep.subr.bf16.mxu0 0
    %165 = vmatpush2.bf16.msra.mxu0 0
    %166 = vmatprep.subr.bf16.mxu0 0
    %167 = vmatpush2.bf16.msra.mxu0 0
    %168 = vmatprep.subr.bf16.mxu0 0
    %169 = vmatpush2.bf16.msra.mxu0 0
    %170 = vmatprep.mubr.bf16.mxu0 0
    %171 = vmatmul.mubr.bf16.gmra.mxu0 %v132
    %v172 = vpop.f32.mrf.mxu0
    %v173 = vadd.f32 0.0, %v172
    %v174 = vpop.f32.mrf.mxu0
    %v175 = vpop.f32.mrf.mxu0
    %v176 = vadd.f32 0.0, %v175
    %v177 = vpop.f32.mrf.mxu0
    %178 = vdwg.mxu0
    %v180 = vsel %vm130, %v128, 0
    %v183 = vsel %vm134, %v125, 0
    %185 = vmatprep.subr.bf16.mxu0 0
    %186 = vmatpush1.bf16.msra.mxu0 0
    %187 = vmatprep.subr.bf16.mxu0 0
    %188 = vmatpush1.bf16.msra.mxu0 0
    %189 = vmatprep.subr.bf16.mxu0 0
    %190 = vmatpush1.bf16.msra.mxu0 0
    %191 = vmatprep.subr.bf16.mxu0 0
    %192 = vmatpush1.bf16.msra.mxu0 0
    %193 = vmatprep.subr.bf16.mxu0 0
    %194 = vmatpush1.bf16.msra.mxu0 0
    %195 = vmatprep.subr.bf16.mxu0 0
    %196 = vmatpush1.bf16.msra.mxu0 0
    %197 = vmatprep.subr.bf16.mxu0 0
    %198 = vmatpush1.bf16.msra.mxu0 0
    %199 = vmatprep.subr.bf16.mxu0 0
    %200 = vmatpush1.bf16.msra.mxu0 %v183
    %201 = vmatprep.subr.bf16.mxu0 0
    %202 = vmatpush2.bf16.msra.mxu0 0
    %203 = vmatprep.subr.bf16.mxu0 0
    %204 = vmatpush2.bf16.msra.mxu0 0
    %205 = vmatprep.subr.bf16.mxu0 0
    %206 = vmatpush2.bf16.msra.mxu0 0
    %207 = vmatprep.subr.bf16.mxu0 0
    %208 = vmatpush2.bf16.msra.mxu0 0
    %209 = vmatprep.subr.bf16.mxu0 0
    %210 = vmatpush2.bf16.msra.mxu0 0
    %211 = vmatprep.subr.bf16.mxu0 0
    %212 = vmatpush2.bf16.msra.mxu0 0
    %213 = vmatprep.subr.bf16.mxu0 0
    %214 = vmatpush2.bf16.msra.mxu0 0
    %215 = vmatprep.subr.bf16.mxu0 0
    %216 = vmatpush2.bf16.msra.mxu0 0
    %217 = vmatprep.mubr.bf16.mxu0 0
    %218 = vmatmul.mubr.bf16.gmra.mxu0 %v180
    %v219 = vpop.f32.mrf.mxu0
    %v220 = vadd.f32 %v173, %v219
    %v221 = vpop.f32.mrf.mxu0
    %v222 = vpop.f32.mrf.mxu0
    %v223 = vadd.f32 %v176, %v222
    %v224 = vpop.f32.mrf.mxu0
    %225 = vdwg.mxu0
    %v226 = vlaneseq
    %v227 = vshrl.u32 %v226, 7
    %v228 = vsub.s32 0, %v227
    %v229 = vrot.slane %v127, %v228
    %v230 = vadd.f32 %v220, %v229
    %v231 = vadd.f32 %v223, %v229
    %v232 = vmax.f32 %v230, 0.0
    %v233 = vmax.f32 %v231, 0.0
    %234 = vmatprep.subr.mxu0 0.0
    %235 = vmatpush1.msra.mxu0 0.0
    %236 = vmatprep.subr.mxu0 0.0
    %237 = vmatpush1.msra.mxu0 0.0
    %238 = vmatprep.subr.mxu0 0.0
    %239 = vmatpush1.msra.mxu0 0.0
    %240 = vmatprep.subr.mxu0 0.0
    %241 = vmatpush1.msra.mxu0 0.0
    %242 = vmatprep.subr.mxu0 0.0
    %243 = vmatpush1.msra.mxu0 0.0
    %244 = vmatprep.subr.mxu0 0.0
    %245 = vmatpush1.msra.mxu0 0.0
    %246 = vmatprep.subr.mxu0 0.0
    %247 = vmatpush1.msra.mxu0 0.0
    %248 = vmatprep.subr.mxu0 0.0
    %249 = vmatpush1.msra.mxu0 0.0
    %250 = vmatprep.subr.mxu0 0.0
    %251 = vmatpush1.msra.mxu0 0.0
    %252 = vmatprep.subr.mxu0 0.0
    %253 = vmatpush1.msra.mxu0 0.0
    %254 = vmatprep.subr.mxu0 0.0
    %255 = vmatpush1.msra.mxu0 0.0
    %256 = vmatprep.subr.mxu0 0.0
    %257 = vmatpush1.msra.mxu0 0.0
    %258 = vmatprep.subr.mxu0 0.0
    %259 = vmatpush1.msra.mxu0 0.0
    %260 = vmatprep.subr.mxu0 0.0
    %261 = vmatpush1.msra.mxu0 0.0
    %262 = vmatprep.subr.mxu0 0.0
    %263 = vmatpush1.msra.mxu0 %v233
    %264 = vmatprep.subr.mxu0 0.0
    %265 = vmatpush1.msra.mxu0 %v232
    %266 = vmatprep.subr.mxu0 0.0
    %267 = vmatpush2.msra.mxu0 0.0
    %268 = vmatprep.subr.mxu0 0.0
    %269 = vmatpush2.msra.mxu0 0.0
    %270 = vmatprep.subr.mxu0 0.0
    %271 = vmatpush2.msra.mxu0 0.0
    %272 = vmatprep.subr.mxu0 0.0
    %273 = vmatpush2.msra.mxu0 0.0
    %274 = vmatprep.subr.mxu0 0.0
    %275 = vmatpush2.msra.mxu0 0.0
    %276 = vmatprep.subr.mxu0 0.0
    %277 = vmatpush2.msra.mxu0 0.0
    %278 = vmatprep.subr.mxu0 0.0
    %279 = vmatpush2.msra.mxu0 0.0
    %280 = vmatprep.subr.mxu0 0.0
    %281 = vmatpush2.msra.mxu0 0.0
    %282 = vmatprep.subr.mxu0 0.0
    %283 = vmatpush2.msra.mxu0 0.0
    %284 = vmatprep.subr.mxu0 0.0
    %285 = vmatpush2.msra.mxu0 0.0
    %286 = vmatprep.subr.mxu0 0.0
    %287 = vmatpush2.msra.mxu0 0.0
    %288 = vmatprep.subr.mxu0 0.0
    %289 = vmatpush2.msra.mxu0 0.0
    %290 = vmatprep.subr.mxu0 0.0
    %291 = vmatpush2.msra.mxu0 0.0
    %292 = vmatprep.subr.mxu0 0.0
    %293 = vmatpush2.msra.mxu0 0.0
    %294 = vmatprep.subr.mxu0 0.0
    %295 = vmatpush2.msra.mxu0 0.0
    %296 = vmatprep.subr.mxu0 0.0
    %297 = vmatpush2.msra.mxu0 0.0
    %298 = vmatprep.mubr.f32.mxu0 0.0
    %299 = vmatmul.mubr.f32.gmra.mxu0 %v45
    %v300 = vpop.f32.mrf.mxu0
    %v301 = vadd.f32 0.0, %v300
    %v302 = vpop.f32.mrf.mxu0
    %303 = vmatprep.mubr.f32.mxu0 0.0
    %304 = vmatmul.mubr.f32.gmra.mxu0 %v48
    %v305 = vpop.f32.mrf.mxu0
    %v306 = vadd.f32 0.0, %v305
    %v307 = vpop.f32.mrf.mxu0
    %308 = vdwg.mxu0
    %v309 = vld [vmem:[#allocation2 + $0x10] sm:$0xf]
    %v310 = vld [vmem:[#allocation2 + $0x14] sm:$0xf]
    %v311 = vld [vmem:[#allocation2 + $0x18] sm:$0xf]
    %v312 = vld [vmem:[#allocation2 + $0x1c] sm:$0xf]
    %v313 = vld [vmem:[#allocation2 + $0x20] sm:$0xf]
    %v314 = vld [vmem:[#allocation2 + $0x24] sm:$0xf]
    %v315 = vld [vmem:[#allocation2 + $0x28] sm:$0xf]
    %v316 = vld [vmem:[#allocation2 + $0x2c] sm:$0xf]
    %v317 = vld [vmem:[%s4 + $0x1] sm:$0x1]
    %v318 = vpack.c.bf16 %v306, %v301
    %v319 = vpack.c.bf16 %v233, %v232
    %v324 = vunpack.c.l.b16 %v313
    %v325 = vunpack.c.l.b16 %v314
    %v326 = vunpack.c.l.b16 %v315
    %v327 = vunpack.c.l.b16 %v316
    %v328 = vpack.c.b16 %v325, %v324
    %v329 = vpack.c.b16 %v327, %v326
    %vm332 = vcmask 261120
    %v334 = vsel %vm332, %v319, 0
    %336 = vmatprep.subr.bf16.mxu0 0
    %337 = vmatpush1.bf16.msra.mxu0 0
    %338 = vmatprep.subr.bf16.mxu0 0
    %339 = vmatpush1.bf16.msra.mxu0 0
    %340 = vmatprep.subr.bf16.mxu0 0
    %341 = vmatpush1.bf16.msra.mxu0 0
    %342 = vmatprep.subr.bf16.mxu0 0
    %343 = vmatpush1.bf16.msra.mxu0 0
    %344 = vmatprep.subr.bf16.mxu0 0
    %345 = vmatpush1.bf16.msra.mxu0 0
    %346 = vmatprep.subr.bf16.mxu0 0
    %347 = vmatpush1.bf16.msra.mxu0 0
    %348 = vmatprep.subr.bf16.mxu0 0
    %349 = vmatpush1.bf16.msra.mxu0 %v329
    %350 = vmatprep.subr.bf16.mxu0 0
    %351 = vmatpush1.bf16.msra.mxu0 %v328
    %352 = vmatprep.subr.bf16.mxu0 0
    %353 = vmatpush2.bf16.msra.mxu0 0
    %354 = vmatprep.subr.bf16.mxu0 0
    %355 = vmatpush2.bf16.msra.mxu0 0
    %356 = vmatprep.subr.bf16.mxu0 0
    %357 = vmatpush2.bf16.msra.mxu0 0
    %358 = vmatprep.subr.bf16.mxu0 0
    %359 = vmatpush2.bf16.msra.mxu0 0
    %360 = vmatprep.subr.bf16.mxu0 0
    %361 = vmatpush2.bf16.msra.mxu0 0
    %362 = vmatprep.subr.bf16.mxu0 0
    %363 = vmatpush2.bf16.msra.mxu0 0
    %364 = vmatprep.subr.bf16.mxu0 0
    %365 = vmatpush2.bf16.msra.mxu0 0
    %366 = vmatprep.subr.bf16.mxu0 0
    %367 = vmatpush2.bf16.msra.mxu0 0
    %368 = vmatprep.mubr.bf16.mxu0 0
    %369 = vmatmul.mubr.bf16.gmra.mxu0 %v334
    %v370 = vpop.f32.mrf.mxu0
    %v371 = vadd.f32 0.0, %v370
    %v372 = vpop.f32.mrf.mxu0
    %v373 = vpop.f32.mrf.mxu0
    %v374 = vadd.f32 0.0, %v373
    %v375 = vpop.f32.mrf.mxu0
    %376 = vdwg.mxu0
    %v381 = vunpack.c.l.b16 %v309
    %v382 = vunpack.c.l.b16 %v310
    %v383 = vunpack.c.l.b16 %v311
    %v384 = vunpack.c.l.b16 %v312
    %v385 = vpack.c.b16 %v382, %v381
    %v386 = vpack.c.b16 %v384, %v383
    %v390 = vsel %vm332, %v318, 0
    %392 = vmatprep.subr.bf16.mxu0 0
    %393 = vmatpush1.bf16.msra.mxu0 0
    %394 = vmatprep.subr.bf16.mxu0 0
    %395 = vmatpush1.bf16.msra.mxu0 0
    %396 = vmatprep.subr.bf16.mxu0 0
    %397 = vmatpush1.bf16.msra.mxu0 0
    %398 = vmatprep.subr.bf16.mxu0 0
    %399 = vmatpush1.bf16.msra.mxu0 0
    %400 = vmatprep.subr.bf16.mxu0 0
    %401 = vmatpush1.bf16.msra.mxu0 0
    %402 = vmatprep.subr.bf16.mxu0 0
    %403 = vmatpush1.bf16.msra.mxu0 0
    %404 = vmatprep.subr.bf16.mxu0 0
    %405 = vmatpush1.bf16.msra.mxu0 %v386
    %406 = vmatprep.subr.bf16.mxu0 0
    %407 = vmatpush1.bf16.msra.mxu0 %v385
    %408 = vmatprep.subr.bf16.mxu0 0
    %409 = vmatpush2.bf16.msra.mxu0 0
    %410 = vmatprep.subr.bf16.mxu0 0
    %411 = vmatpush2.bf16.msra.mxu0 0
    %412 = vmatprep.subr.bf16.mxu0 0
    %413 = vmatpush2.bf16.msra.mxu0 0
    %414 = vmatprep.subr.bf16.mxu0 0
    %415 = vmatpush2.bf16.msra.mxu0 0
    %416 = vmatprep.subr.bf16.mxu0 0
    %417 = vmatpush2.bf16.msra.mxu0 0
    %418 = vmatprep.subr.bf16.mxu0 0
    %419 = vmatpush2.bf16.msra.mxu0 0
    %420 = vmatprep.subr.bf16.mxu0 0
    %421 = vmatpush2.bf16.msra.mxu0 0
    %422 = vmatprep.subr.bf16.mxu0 0
    %423 = vmatpush2.bf16.msra.mxu0 0
    %424 = vmatprep.mubr.bf16.mxu0 0
    %425 = vmatmul.mubr.bf16.gmra.mxu0 %v390
    %v426 = vpop.f32.mrf.mxu0
    %v427 = vadd.f32 %v371, %v426
    %v428 = vpop.f32.mrf.mxu0
    %v429 = vpop.f32.mrf.mxu0
    %v430 = vadd.f32 %v374, %v429
    %v431 = vpop.f32.mrf.mxu0
    %432 = vdwg.mxu0
    %v433 = vlaneseq
    %v434 = vshrl.u32 %v433, 7
    %v435 = vsub.s32 0, %v434
    %v436 = vrot.slane %v317, %v435
    %v437 = vadd.f32 %v427, %v436
    %v438 = vadd.f32 %v430, %v436
    %v439 = vld [vmem:[#allocation2 + $0x30] sm:$0xf]
    %v440 = vld [vmem:[#allocation2 + $0x34] sm:$0xf]
    %v441 = vld [vmem:[#allocation2 + $0x38] sm:$0xf]
    %v442 = vld [vmem:[#allocation2 + $0x3c] sm:$0xf]
    %v443 = vpack.c.bf16 %v438, %v437
    %v444 = vld [vmem:[%s4 + $0x2] sm:$0x1]
    %v445 = vlaneseq
    %v446 = vshrl.u32 %v445, 7
    %v447 = vsub.s32 0, %v446
    %v448 = vrot.slane %v444, %v447
    %v453 = vunpack.c.l.b16 %v439
    %v454 = vunpack.c.l.b16 %v440
    %v455 = vunpack.c.l.b16 %v441
    %v456 = vunpack.c.l.b16 %v442
    %v457 = vpack.c.b16 %v454, %v453
    %v458 = vpack.c.b16 %v456, %v455
    %v462 = vsel %vm332, %v443, 0
    %464 = vmatprep.subr.bf16.mxu0 0
    %465 = vmatpush1.bf16.msra.mxu0 0
    %466 = vmatprep.subr.bf16.mxu0 0
    %467 = vmatpush1.bf16.msra.mxu0 0
    %468 = vmatprep.subr.bf16.mxu0 0
    %469 = vmatpush1.bf16.msra.mxu0 0
    %470 = vmatprep.subr.bf16.mxu0 0
    %471 = vmatpush1.bf16.msra.mxu0 0
    %472 = vmatprep.subr.bf16.mxu0 0
    %473 = vmatpush1.bf16.msra.mxu0 0
    %474 = vmatprep.subr.bf16.mxu0 0
    %475 = vmatpush1.bf16.msra.mxu0 0
    %476 = vmatprep.subr.bf16.mxu0 0
    %477 = vmatpush1.bf16.msra.mxu0 %v458
    %478 = vmatprep.subr.bf16.mxu0 0
    %479 = vmatpush1.bf16.msra.mxu0 %v457
    %480 = vmatprep.subr.bf16.mxu0 0
    %481 = vmatpush2.bf16.msra.mxu0 0
    %482 = vmatprep.subr.bf16.mxu0 0
    %483 = vmatpush2.bf16.msra.mxu0 0
    %484 = vmatprep.subr.bf16.mxu0 0
    %485 = vmatpush2.bf16.msra.mxu0 0
    %486 = vmatprep.subr.bf16.mxu0 0
    %487 = vmatpush2.bf16.msra.mxu0 0
    %488 = vmatprep.subr.bf16.mxu0 0
    %489 = vmatpush2.bf16.msra.mxu0 0
    %490 = vmatprep.subr.bf16.mxu0 0
    %491 = vmatpush2.bf16.msra.mxu0 0
    %492 = vmatprep.subr.bf16.mxu0 0
    %493 = vmatpush2.bf16.msra.mxu0 0
    %494 = vmatprep.subr.bf16.mxu0 0
    %495 = vmatpush2.bf16.msra.mxu0 0
    %496 = vmatprep.mubr.bf16.mxu0 0
    %497 = vmatmul.mubr.bf16.gmra.mxu0 %v462
    %v498 = vpop.f32.mrf.mxu0
    %v499 = vadd.f32 %v448, %v498
    %v500 = vpop.f32.mrf.mxu0
    %v501 = vpop.f32.mrf.mxu0
    %v502 = vadd.f32 %v448, %v501
    %v503 = vpop.f32.mrf.mxu0
    %504 = vdwg.mxu0
    %v505 = vmax.f32 %v499, 0.0
    %v506 = vmax.f32 %v502, 0.0
    %v507 = vld [vmem:[#allocation2 + $0x40] sm:$0xf]
    %v508 = vld [vmem:[#allocation2 + $0x44] sm:$0xf]
    %v509 = vld [vmem:[#allocation2 + $0x48] sm:$0xf]
    %v510 = vld [vmem:[#allocation2 + $0x4c] sm:$0xf]
    %v511 = vpack.c.bf16 %v506, %v505
    %v512 = vld [vmem:[%s4 + $0x3] sm:$0x1]
    %v513 = vlaneseq
    %v514 = vshrl.u32 %v513, 7
    %v515 = vsub.s32 0, %v514
    %v516 = vrot.slane %v512, %v515
    %v521 = vunpack.c.l.b16 %v507
    %v522 = vunpack.c.l.b16 %v508
    %v523 = vunpack.c.l.b16 %v509
    %v524 = vunpack.c.l.b16 %v510
    %v525 = vpack.c.b16 %v522, %v521
    %v526 = vpack.c.b16 %v524, %v523
    %v530 = vsel %vm332, %v511, 0
    %532 = vmatprep.subr.bf16.mxu0 0
    %533 = vmatpush1.bf16.msra.mxu0 0
    %534 = vmatprep.subr.bf16.mxu0 0
    %535 = vmatpush1.bf16.msra.mxu0 0
    %536 = vmatprep.subr.bf16.mxu0 0
    %537 = vmatpush1.bf16.msra.mxu0 0
    %538 = vmatprep.subr.bf16.mxu0 0
    %539 = vmatpush1.bf16.msra.mxu0 0
    %540 = vmatprep.subr.bf16.mxu0 0
    %541 = vmatpush1.bf16.msra.mxu0 0
    %542 = vmatprep.subr.bf16.mxu0 0
    %543 = vmatpush1.bf16.msra.mxu0 0
    %544 = vmatprep.subr.bf16.mxu0 0
    %545 = vmatpush1.bf16.msra.mxu0 %v526
    %546 = vmatprep.subr.bf16.mxu0 0
    %547 = vmatpush1.bf16.msra.mxu0 %v525
    %548 = vmatprep.subr.bf16.mxu0 0
    %549 = vmatpush2.bf16.msra.mxu0 0
    %550 = vmatprep.subr.bf16.mxu0 0
    %551 = vmatpush2.bf16.msra.mxu0 0
    %552 = vmatprep.subr.bf16.mxu0 0
    %553 = vmatpush2.bf16.msra.mxu0 0
    %554 = vmatprep.subr.bf16.mxu0 0
    %555 = vmatpush2.bf16.msra.mxu0 0
    %556 = vmatprep.subr.bf16.mxu0 0
    %557 = vmatpush2.bf16.msra.mxu0 0
    %558 = vmatprep.subr.bf16.mxu0 0
    %559 = vmatpush2.bf16.msra.mxu0 0
    %560 = vmatprep.subr.bf16.mxu0 0
    %561 = vmatpush2.bf16.msra.mxu0 0
    %562 = vmatprep.subr.bf16.mxu0 0
    %563 = vmatpush2.bf16.msra.mxu0 0
    %564 = vmatprep.mubr.bf16.mxu0 0
    %565 = vmatmul.mubr.bf16.gmra.mxu0 %v530
    %v566 = vpop.f32.mrf.mxu0
    %v567 = vadd.f32 %v516, %v566
    %v568 = vpop.f32.mrf.mxu0
    %v569 = vpop.f32.mrf.mxu0
    %v570 = vadd.f32 %v516, %v569
    %v571 = vpop.f32.mrf.mxu0
    %572 = vdwg.mxu0
    %573 = vst [vmem:[#allocation5] sm:$0xff] %v567
    %574 = vst [vmem:[#allocation5 + $0x8] sm:$0xff] %v570
    %v575 = vld [vmem:[%s2] sm:$0x3]
    %v577 = vsel %vm43, %v575, 0
    %579 = vmatprep.subr.mxu0 0.0
    %580 = vmatpush1.msra.mxu0 0.0
    %581 = vmatprep.subr.mxu0 0.0
    %582 = vmatpush1.msra.mxu0 0.0
    %583 = vmatprep.subr.mxu0 0.0
    %584 = vmatpush1.msra.mxu0 0.0
    %585 = vmatprep.subr.mxu0 0.0
    %586 = vmatpush1.msra.mxu0 0.0
    %587 = vmatprep.subr.mxu0 0.0
    %588 = vmatpush1.msra.mxu0 0.0
    %589 = vmatprep.subr.mxu0 0.0
    %590 = vmatpush1.msra.mxu0 0.0
    %591 = vmatprep.subr.mxu0 0.0
    %592 = vmatpush1.msra.mxu0 0.0
    %593 = vmatprep.subr.mxu0 0.0
    %594 = vmatpush1.msra.mxu0 0.0
    %595 = vmatprep.subr.mxu0 0.0
    %596 = vmatpush1.msra.mxu0 0.0
    %597 = vmatprep.subr.mxu0 0.0
    %598 = vmatpush1.msra.mxu0 0.0
    %599 = vmatprep.subr.mxu0 0.0
    %600 = vmatpush1.msra.mxu0 0.0
    %601 = vmatprep.subr.mxu0 0.0
    %602 = vmatpush1.msra.mxu0 0.0
    %603 = vmatprep.subr.mxu0 0.0
    %604 = vmatpush1.msra.mxu0 0.0
    %605 = vmatprep.subr.mxu0 0.0
    %606 = vmatpush1.msra.mxu0 0.0
    %607 = vmatprep.subr.mxu0 0.0
    %608 = vmatpush1.msra.mxu0 %v438
    %609 = vmatprep.subr.mxu0 0.0
    %610 = vmatpush1.msra.mxu0 %v437
    %611 = vmatprep.subr.mxu0 0.0
    %612 = vmatpush2.msra.mxu0 0.0
    %613 = vmatprep.subr.mxu0 0.0
    %614 = vmatpush2.msra.mxu0 0.0
    %615 = vmatprep.subr.mxu0 0.0
    %616 = vmatpush2.msra.mxu0 0.0
    %617 = vmatprep.subr.mxu0 0.0
    %618 = vmatpush2.msra.mxu0 0.0
    %619 = vmatprep.subr.mxu0 0.0
    %620 = vmatpush2.msra.mxu0 0.0
    %621 = vmatprep.subr.mxu0 0.0
    %622 = vmatpush2.msra.mxu0 0.0
    %623 = vmatprep.subr.mxu0 0.0
    %624 = vmatpush2.msra.mxu0 0.0
    %625 = vmatprep.subr.mxu0 0.0
    %626 = vmatpush2.msra.mxu0 0.0
    %627 = vmatprep.subr.mxu0 0.0
    %628 = vmatpush2.msra.mxu0 0.0
    %629 = vmatprep.subr.mxu0 0.0
    %630 = vmatpush2.msra.mxu0 0.0
    %631 = vmatprep.subr.mxu0 0.0
    %632 = vmatpush2.msra.mxu0 0.0
    %633 = vmatprep.subr.mxu0 0.0
    %634 = vmatpush2.msra.mxu0 0.0
    %635 = vmatprep.subr.mxu0 0.0
    %636 = vmatpush2.msra.mxu0 0.0
    %637 = vmatprep.subr.mxu0 0.0
    %638 = vmatpush2.msra.mxu0 0.0
    %639 = vmatprep.subr.mxu0 0.0
    %640 = vmatpush2.msra.mxu0 0.0
    %641 = vmatprep.subr.mxu0 0.0
    %642 = vmatpush2.msra.mxu0 0.0
    %643 = vmatprep.mubr.f32.mxu0 0.0
    %644 = vmatmul.mubr.f32.gmra.mxu0 %v577
    %v645 = vpop.f32.mrf.mxu0
    %v646 = vadd.f32 0.0, %v645
    %v647 = vpop.f32.mrf.mxu0
    %648 = vdwg.mxu0
    %v649 = vld [vmem:[#allocation2 + $0x50] sm:$0xf]
    %v650 = vld [vmem:[#allocation2 + $0x54] sm:$0xf]
    %v651 = vld [vmem:[#allocation2 + $0x58] sm:$0xf]
    %v652 = vld [vmem:[#allocation2 + $0x5c] sm:$0xf]
    %v653 = vpack.c.bf16 %v646, %v646
    %v654 = vld [vmem:[%s4 + $0x4] sm:$0x1]
    %v655 = vlaneseq
    %v656 = vshrl.u32 %v655, 7
    %v657 = vsub.s32 0, %v656
    %v658 = vrot.slane %v654, %v657
    %v663 = vunpack.c.l.b16 %v649
    %v664 = vunpack.c.l.b16 %v650
    %v665 = vunpack.c.l.b16 %v651
    %v666 = vunpack.c.l.b16 %v652
    %v667 = vpack.c.b16 %v664, %v663
    %v668 = vpack.c.b16 %v666, %v665
    %v672 = vsel %vm332, %v653, 0
    %674 = vmatprep.subr.bf16.mxu0 0
    %675 = vmatpush1.bf16.msra.mxu0 0
    %676 = vmatprep.subr.bf16.mxu0 0
    %677 = vmatpush1.bf16.msra.mxu0 0
    %678 = vmatprep.subr.bf16.mxu0 0
    %679 = vmatpush1.bf16.msra.mxu0 0
    %680 = vmatprep.subr.bf16.mxu0 0
    %681 = vmatpush1.bf16.msra.mxu0 0
    %682 = vmatprep.subr.bf16.mxu0 0
    %683 = vmatpush1.bf16.msra.mxu0 0
    %684 = vmatprep.subr.bf16.mxu0 0
    %685 = vmatpush1.bf16.msra.mxu0 0
    %686 = vmatprep.subr.bf16.mxu0 0
    %687 = vmatpush1.bf16.msra.mxu0 %v668
    %688 = vmatprep.subr.bf16.mxu0 0
    %689 = vmatpush1.bf16.msra.mxu0 %v667
    %690 = vmatprep.subr.bf16.mxu0 0
    %691 = vmatpush2.bf16.msra.mxu0 0
    %692 = vmatprep.subr.bf16.mxu0 0
    %693 = vmatpush2.bf16.msra.mxu0 0
    %694 = vmatprep.subr.bf16.mxu0 0
    %695 = vmatpush2.bf16.msra.mxu0 0
    %696 = vmatprep.subr.bf16.mxu0 0
    %697 = vmatpush2.bf16.msra.mxu0 0
    %698 = vmatprep.subr.bf16.mxu0 0
    %699 = vmatpush2.bf16.msra.mxu0 0
    %700 = vmatprep.subr.bf16.mxu0 0
    %701 = vmatpush2.bf16.msra.mxu0 0
    %702 = vmatprep.subr.bf16.mxu0 0
    %703 = vmatpush2.bf16.msra.mxu0 0
    %704 = vmatprep.subr.bf16.mxu0 0
    %705 = vmatpush2.bf16.msra.mxu0 0
    %706 = vmatprep.mubr.bf16.mxu0 0
    %707 = vmatmul.mubr.bf16.gmra.mxu0 %v672
    %v708 = vpop.f32.mrf.mxu0
    %v709 = vadd.f32 %v658, %v708
    %v710 = vpop.f32.mrf.mxu0
    %v711 = vpop.f32.mrf.mxu0
    %v712 = vpop.f32.mrf.mxu0
    %713 = vdwg.mxu0
    %v714 = vmax.f32 %v709, 0.0
    %v715 = vld [vmem:[#allocation2 + $0x60] sm:$0xf]
    %v716 = vld [vmem:[#allocation2 + $0x64] sm:$0xf]
    %v717 = vld [vmem:[#allocation2 + $0x68] sm:$0xf]
    %v718 = vld [vmem:[#allocation2 + $0x6c] sm:$0xf]
    %v719 = vpack.c.bf16 %v714, %v714
    %v720 = vld [vmem:[%s4 + $0x5] sm:$0x1]
    %v721 = vlaneseq
    %v722 = vshrl.u32 %v721, 7
    %v723 = vsub.s32 0, %v722
    %v724 = vrot.slane %v720, %v723
    %v729 = vunpack.c.l.b16 %v715
    %v730 = vunpack.c.l.b16 %v716
    %v731 = vunpack.c.l.b16 %v717
    %v732 = vunpack.c.l.b16 %v718
    %v733 = vpack.c.b16 %v730, %v729
    %v734 = vpack.c.b16 %v732, %v731
    %v738 = vsel %vm332, %v719, 0
    %740 = vmatprep.subr.bf16.mxu0 0
    %741 = vmatpush1.bf16.msra.mxu0 0
    %742 = vmatprep.subr.bf16.mxu0 0
    %743 = vmatpush1.bf16.msra.mxu0 0
    %744 = vmatprep.subr.bf16.mxu0 0
    %745 = vmatpush1.bf16.msra.mxu0 0
    %746 = vmatprep.subr.bf16.mxu0 0
    %747 = vmatpush1.bf16.msra.mxu0 0
    %748 = vmatprep.subr.bf16.mxu0 0
    %749 = vmatpush1.bf16.msra.mxu0 0
    %750 = vmatprep.subr.bf16.mxu0 0
    %751 = vmatpush1.bf16.msra.mxu0 0
    %752 = vmatprep.subr.bf16.mxu0 0
    %753 = vmatpush1.bf16.msra.mxu0 %v734
    %754 = vmatprep.subr.bf16.mxu0 0
    %755 = vmatpush1.bf16.msra.mxu0 %v733
    %756 = vmatprep.subr.bf16.mxu0 0
    %757 = vmatpush2.bf16.msra.mxu0 0
    %758 = vmatprep.subr.bf16.mxu0 0
    %759 = vmatpush2.bf16.msra.mxu0 0
    %760 = vmatprep.subr.bf16.mxu0 0
    %761 = vmatpush2.bf16.msra.mxu0 0
    %762 = vmatprep.subr.bf16.mxu0 0
    %763 = vmatpush2.bf16.msra.mxu0 0
    %764 = vmatprep.subr.bf16.mxu0 0
    %765 = vmatpush2.bf16.msra.mxu0 0
    %766 = vmatprep.subr.bf16.mxu0 0
    %767 = vmatpush2.bf16.msra.mxu0 0
    %768 = vmatprep.subr.bf16.mxu0 0
    %769 = vmatpush2.bf16.msra.mxu0 0
    %770 = vmatprep.subr.bf16.mxu0 0
    %771 = vmatpush2.bf16.msra.mxu0 0
    %772 = vmatprep.mubr.bf16.mxu0 0
    %773 = vmatmul.mubr.bf16.gmra.mxu0 %v738
    %v774 = vpop.f32.mrf.mxu0
    %v775 = vadd.f32 %v724, %v774
    %v776 = vpop.f32.mrf.mxu0
    %v777 = vpop.f32.mrf.mxu0
    %v778 = vpop.f32.mrf.mxu0
    %779 = vdwg.mxu0
    %780 = vst [vmem:[#allocation6] sm:$0x3] %v775
    // Predicated region
    $region26: #{tpu_custom_call.1} parent=1 // pred_check
      _
    $region27: #{tpu_custom_call.1} parent=1 // pred_check_branch
      %782 = sbr.rel (0) target = $region29
    $region28: #{tpu_custom_call.1} parent=1 // pred_region
      %s784 = ssub.s32 256, 256
      %785 = vsyncadd [#allocation4], %s784
      %s786 = sshll.u32 [#allocation5], 4
      %s787 = int_to_ptr.vmem [resolvable:$true] %s786
      %792 = dma.vmem_to_hbm [thread:$0]  %s787, 256, %s5, [#allocation4], 128, 128, 8
    $region29: #{tpu_custom_call.1} parent=1 // pred_fallthru
      _
    // Predicated region
    $region30: #{tpu_custom_call.1} parent=1 // pred_check
      _
    $region31: #{tpu_custom_call.1} parent=1 // pred_check_branch
      %794 = sbr.rel (0) target = $region33
    $region32: #{tpu_custom_call.1} parent=1 // pred_region
      %s796 = ssub.s32 32, 32
      %797 = vsyncadd [#allocation7], %s796
      %s799 = sshll.u32 [#allocation6], 4
      %s800 = int_to_ptr.vmem [resolvable:$true] %s799
      %802 = dma.vmem_to_hbm [thread:$0]  %s800, 32, %s6, [#allocation7]
    $region33: #{tpu_custom_call.1} parent=1 // pred_fallthru
      _
    // Predicated region
    $region34: #{tpu_custom_call.1} parent=1 // pred_check
      _
    $region35: #{tpu_custom_call.1} parent=1 // pred_check_branch
      %804 = sbr.rel (0) target = $region37
    $region36: #{tpu_custom_call.1} parent=1 // pred_region
      %805 = dma.done [#allocation4], 256
    $region37: #{tpu_custom_call.1} parent=1 // pred_fallthru
      _
    // Predicated region
    $region38: #{tpu_custom_call.1} parent=1 // pred_check
      _
    $region39: #{tpu_custom_call.1} parent=1 // pred_check_branch
      %807 = sbr.rel (0) target = $region41
    $region40: #{tpu_custom_call.1} parent=1 // pred_region
      %808 = dma.done [#allocation7], 32
    $region41: #{tpu_custom_call.1} parent=1 // pred_fallthru
      _
    %809 = vsyncpa [#allocation3], 1
    %810 = vsyncpa [#allocation4], 1
    %811 = vsyncpa [#allocation7], 1

</llo_original>
